<compile_context>
chip_gen: v7x
topology: tpu7x:2x2x1
jax: 0.10.0
libtpu: 0.0.40
codegen_flags: <defaults>
</compile_context>

<pallas_src>
import jax
import jax.numpy as jnp
from jax import lax
from jax.experimental import pallas as pl
from jax.experimental.pallas import tpu as pltpu

B, S, T_TGT = 2, 8, 8          # batch, src seq len, tgt seq len
E, H = 32, 32                  # embedding dim, hidden dim
V_SRC, V_TGT = 48, 64          # source / target vocab sizes
B_PAD = 8                      # batch padded to a full sublane
V_PAD = 128                    # logits padded to a full lane width
PAD_IDX = 0                    # TODO(synk): stands in for GPT2Tokenizer.pad_token_id


def _combine_gates(gates, c):
    """LSTM gate combine.  PyTorch nn.LSTM gate order: i, f, g, o.

    sigmoid on the full (B_PAD, 4H) row (one EUP vreg); tanh only on the g slice.
    The folded bias stands in for PyTorch's b_ih + b_hh (sum them when loading real
    nn.LSTM weights).
    """
    sig = jax.nn.sigmoid(gates)                         # (B_PAD, 4H) full vreg
    g = jnp.tanh(gates[:, 2 * H:3 * H])                 # tanh on g lanes only
    i = sig[:, 0 * H:1 * H]
    f = sig[:, 1 * H:2 * H]
    o = sig[:, 3 * H:4 * H]
    c_new = f * c + i * g
    h_new = o * jnp.tanh(c_new)
    return h_new, c_new


def _encoder_recurrence(src_ref, enc_ew_ref, enc_whh_ref):
    """Shared encoder body: one big x-path matmul, then h-only recurrence."""
    src_iota = lax.broadcasted_iota(jnp.int32, (S * B_PAD, V_SRC), 1)
    src_oh = (src_iota == src_ref[...]).astype(jnp.float32)        # (S*B_PAD, V_SRC)
    # One MXU push for the whole sequence's input-gate contributions (+ folded bias).
    xg_all = jnp.dot(src_oh, enc_ew_ref[...],
                     preferred_element_type=jnp.float32)           # (S*B_PAD, 4H)

    h = jnp.zeros((B_PAD, H), jnp.float32)
    c = jnp.zeros((B_PAD, H), jnp.float32)
    for t in range(S):                                             # static unroll
        gates = (xg_all[t * B_PAD:(t + 1) * B_PAD, :]
                 + jnp.dot(h, enc_whh_ref[...],
                           preferred_element_type=jnp.float32))
        h, c = _combine_gates(gates, c)
    return h, c


# ---------------------------------------------------------------------------
# Encoder-only kernel (the LSTMEncoder module itself): src tokens -> (h, c).
# ---------------------------------------------------------------------------
def encoder_kernel(src_ref, enc_ew_ref, enc_whh_ref, h_out_ref, c_out_ref):
    h, c = _encoder_recurrence(src_ref, enc_ew_ref, enc_whh_ref)
    h_out_ref[...] = h
    c_out_ref[...] = c


def run_encoder(src_flat, enc_ew, enc_whh):
    vm = pl.BlockSpec(memory_space=pltpu.MemorySpace.VMEM)
    return pl.pallas_call(
        encoder_kernel,
        out_shape=(jax.ShapeDtypeStruct((B_PAD, H), jnp.float32),
                   jax.ShapeDtypeStruct((B_PAD, H), jnp.float32)),
        in_specs=[vm, vm, vm],
        out_specs=(vm, vm),
    )(src_flat, enc_ew, enc_whh)


# ---------------------------------------------------------------------------
# Fully fused seq2seq kernel: encoder recurrence + all decode steps, one call.
# ---------------------------------------------------------------------------
def seq2seq_kernel(src_ref, enc_ew_ref, enc_whh_ref, dec_ew_ref, dec_whh_ref,
                   wout_ref, bout_ref, tgt_ref, tf_ref, out_ref):
    # -------- encoder --------
    h, c = _encoder_recurrence(src_ref, enc_ew_ref, enc_whh_ref)

    # -------- decoder --------
    out_ref[0] = jnp.zeros((B_PAD, V_PAD), jnp.float32)            # t = 0 row stays zero

    v_iota = lax.broadcasted_iota(jnp.int32, (B_PAD, V_TGT), 1)
    bout_b = pl.broadcast_to(bout_ref[...], (B_PAD, V_PAD))        # hoisted once

    # First decoder input = decoder_input_ids[:, 0] (<sos>), carried as a one-hot.
    x_oh = (v_iota == tgt_ref[0]).astype(jnp.float32)              # (B_PAD, V_TGT)

    for t in range(1, T_TGT):                                      # static unroll
        # Two independent MXU pushes (no concat); embedding + bias folded into dec_ew.
        gates = (jnp.dot(x_oh, dec_ew_ref[...], preferred_element_type=jnp.float32)
                 + jnp.dot(h, dec_whh_ref[...], preferred_element_type=jnp.float32))
        h, c = _combine_gates(gates, c)

        # Lane-dense (128-wide) logits; padded lanes carry zeros (benign).
        logits = jnp.dot(h, wout_ref[...], preferred_element_type=jnp.float32) + bout_b
        out_ref[t] = logits

        # argmax (first maximal index) restricted to the real vocab lanes.
        lr = logits[:, :V_TGT]
        m = jnp.max(lr, axis=1, keepdims=True)
        top1 = jnp.min(jnp.where(lr == m, v_iota, V_TGT), axis=1, keepdims=True)
        pred_oh = (v_iota == top1).astype(jnp.float32)

        # Per-step scalar teacher-forcing coin applied to the whole batch.
        tgt_oh = (v_iota == tgt_ref[t]).astype(jnp.float32)
        teacher_force = tf_ref[t] != 0
        x_oh = jnp.where(teacher_force, tgt_oh, pred_oh)


def run_seq2seq(src_flat, enc_ew, enc_whh, dec_ew, dec_whh,
                wout_pad, bout_pad, tgt_pad, tf_mask):
    vm = pl.BlockSpec(memory_space=pltpu.MemorySpace.VMEM)
    sm = pl.BlockSpec(memory_space=pltpu.MemorySpace.SMEM)
    return pl.pallas_call(
        seq2seq_kernel,
        out_shape=jax.ShapeDtypeStruct((T_TGT, B_PAD, V_PAD), jnp.float32),
        in_specs=[vm, vm, vm, vm, vm, vm, vm, vm, sm],
        out_specs=vm,
    )(src_flat, enc_ew, enc_whh, dec_ew, dec_whh, wout_pad, bout_pad, tgt_pad, tf_mask)


# ---------------------------------------------------------------------------
# Parameters (deterministic synthetic init) and the forward passes.
# ---------------------------------------------------------------------------
def init_params(key):
    ks = jax.random.split(key, 10)
    s = 0.1
    enc_emb = jax.random.normal(ks[0], (V_SRC, E), jnp.float32) * s
    enc_emb = enc_emb.at[PAD_IDX].set(0.0)                 # nn.Embedding(padding_idx=...)
    enc_wih = jax.random.normal(ks[1], (E, 4 * H), jnp.float32) * s
    enc_whh = jax.random.normal(ks[2], (H, 4 * H), jnp.float32) * s
    enc_b = jax.random.normal(ks[3], (1, 4 * H), jnp.float32) * s      # = b_ih + b_hh
    dec_emb = jax.random.normal(ks[4], (V_TGT, E), jnp.float32) * s
    dec_wih = jax.random.normal(ks[5], (E, 4 * H), jnp.float32) * s
    dec_whh = jax.random.normal(ks[6], (H, 4 * H), jnp.float32) * s
    dec_b = jax.random.normal(ks[7], (1, 4 * H), jnp.float32) * s      # = b_ih + b_hh
    wout = jax.random.normal(ks[8], (H, V_TGT), jnp.float32) * s
    bout = jax.random.normal(ks[9], (1, V_TGT), jnp.float32) * s
    # Constant folds (outside the kernels, once): emb @ Wih + b.  One-hot rows sum to
    # exactly 1, so the bias rides through the x-path matmul correctly; the PAD row of
    # enc_emb is zero, so PAD tokens contribute only the bias (nn.LSTM semantics).
    enc_ew = jnp.dot(enc_emb, enc_wih) + enc_b             # (V_SRC, 4H)
    dec_ew = jnp.dot(dec_emb, dec_wih) + dec_b             # (V_TGT, 4H)
    return dict(
        enc_ew=enc_ew, enc_whh=enc_whh,
        dec_ew=dec_ew, dec_whh=dec_whh,
        dec_wout_pad=jnp.zeros((H, V_PAD), jnp.float32).at[:, :V_TGT].set(wout),
        dec_bout_pad=jnp.zeros((1, V_PAD), jnp.float32).at[:, :V_TGT].set(bout),
    )


def _src_flat_pad(src):
    """(B, S) int32 tokens -> (S*B_PAD, 1) time-major, batch padded with PAD_IDX."""
    bsz = src.shape[0]
    src_tm = jnp.transpose(src, (1, 0))                               # (S, B)
    pad = jnp.full((S, B_PAD), PAD_IDX, jnp.int32).at[:, :bsz].set(src_tm)
    return pad.reshape(S * B_PAD, 1)


def lstm_encoder_forward(params, src):
    """Pallas equivalent of LSTMEncoder.forward: src -> (hidden, cell), each (1, B, H)."""
    h_pad, c_pad = run_encoder(_src_flat_pad(src), params["enc_ew"], params["enc_whh"])
    bsz = src.shape[0]
    return h_pad[None, :bsz, :], c_pad[None, :bsz, :]


def lstm_seq2seq_forward(params, src, decoder_input_ids, tf_key,
                         teacher_forcing_ratio=0.5):
    batch_size, tgt_len = decoder_input_ids.shape

    # TODO(synk): torch.rand(1).item() teacher-forcing coin flip replaced by
    # deterministic jax.random draws (one scalar coin per decode step).
    coins = jax.random.uniform(tf_key, (tgt_len,))
    tf_mask = (coins < teacher_forcing_ratio).astype(jnp.int32)       # (T,)

    tgt_tm = jnp.transpose(decoder_input_ids, (1, 0))                 # (T, B)
    tgt_pad = jnp.zeros((tgt_len, B_PAD), jnp.int32).at[:, :batch_size].set(tgt_tm)
    tgt_pad = tgt_pad[:, :, None]                                     # (T, B_PAD, 1)

    out_pad = run_seq2seq(
        _src_flat_pad(src),
        params["enc_ew"], params["enc_whh"],
        params["dec_ew"], params["dec_whh"],
        params["dec_wout_pad"], params["dec_bout_pad"],
        tgt_pad, tf_mask)

    # Strip batch / lane padding, back to torch layout (B, T, V_TGT).
    return jnp.transpose(out_pad[:, :batch_size, :V_TGT], (1, 0, 2))


if __name__ == "__main__":
    key = jax.random.PRNGKey(0)
    k_params, k_src, k_tgt, k_tf = jax.random.split(key, 4)

    params = init_params(k_params)
    src = jax.random.randint(k_src, (B, S), 0, V_SRC, dtype=jnp.int32)
    decoder_input_ids = jax.random.randint(k_tgt, (B, T_TGT), 0, V_TGT, dtype=jnp.int32)

    hidden, cell = jax.block_until_ready(lstm_encoder_forward(params, src))
    assert hidden.shape == (1, B, H) and cell.shape == (1, B, H)
    assert bool(jnp.all(jnp.isfinite(hidden))) and bool(jnp.all(jnp.isfinite(cell)))

    outputs = jax.block_until_ready(
        lstm_seq2seq_forward(params, src, decoder_input_ids, k_tf))

    assert outputs.shape == (B, T_TGT, V_TGT)
    assert outputs.dtype == jnp.float32
    assert bool(jnp.all(outputs[:, 0, :] == 0.0))       # first step stays zero, as in torch
    assert bool(jnp.all(jnp.isfinite(outputs)))
    print("KERNEL_OK")
</pallas_src>

<mosaic_0001>
module attributes {stable_mosaic.version = 11 : i64} {
  func.func @encoder_kernel(%arg0: memref<64x1xi32, #tpu.memory_space<vmem>>, %arg1: memref<48x128xf32, #tpu.memory_space<vmem>>, %arg2: memref<32x128xf32, #tpu.memory_space<vmem>>, %arg3: memref<8x32xf32, #tpu.memory_space<vmem>>, %arg4: memref<8x32xf32, #tpu.memory_space<vmem>>) attributes {dimension_semantics = [], scalar_prefetch = 0 : i64, scratch_operands = 0 : i64, tpu.core_type = #tpu.core_type<tc>} {
    %0 = tpu.iota {dimensions = array<i32: 1>} : vector<64x48xi32>
    %c0 = arith.constant 0 : index
    %c0_0 = arith.constant 0 : index
    %1 = vector.load %arg0[%c0, %c0_0] : memref<64x1xi32, #tpu.memory_space<vmem>>, vector<64x1xi32>
    %2 = vector.broadcast %1 : vector<64x1xi32> to vector<64x48xi32>
    %3 = arith.cmpi eq, %0, %2 : vector<64x48xi32>
    %4 = arith.extui %3 : vector<64x48xi1> to vector<64x48xi32>
    %5 = arith.sitofp %4 : vector<64x48xi32> to vector<64x48xf32>
    %c0_1 = arith.constant 0 : index
    %c0_2 = arith.constant 0 : index
    %6 = vector.load %arg1[%c0_1, %c0_2] : memref<48x128xf32, #tpu.memory_space<vmem>>, vector<48x128xf32>
    %cst = arith.constant dense<0.000000e+00> : vector<64x128xf32>
    %7 = tpu.matmul %5, %6, %cst {dimension_numbers = #tpu.dot_dimension_numbers<[1], [0], [0], [1], [0, 0, 1, 1], [], []>} : vector<64x48xf32>, vector<48x128xf32>, vector<64x128xf32> -> vector<64x128xf32>
    %cst_3 = arith.constant 0.000000e+00 : f32
    %8 = vector.broadcast %cst_3 : f32 to vector<8x32xf32>
    %cst_4 = arith.constant 0.000000e+00 : f32
    %9 = vector.broadcast %cst_4 : f32 to vector<8x32xf32>
    %10 = vector.extract_strided_slice %7 {offsets = [0, 0], sizes = [8, 128], strides = [1, 1]} : vector<64x128xf32> to vector<8x128xf32>
    %c0_5 = arith.constant 0 : index
    %c0_6 = arith.constant 0 : index
    %11 = vector.load %arg2[%c0_5, %c0_6] : memref<32x128xf32, #tpu.memory_space<vmem>>, vector<32x128xf32>
    %cst_7 = arith.constant dense<0.000000e+00> : vector<8x128xf32>
    %12 = tpu.matmul %8, %11, %cst_7 {dimension_numbers = #tpu.dot_dimension_numbers<[1], [0], [0], [1], [0, 0, 1, 1], [], []>} : vector<8x32xf32>, vector<32x128xf32>, vector<8x128xf32> -> vector<8x128xf32>
    %13 = arith.addf %10, %12 : vector<8x128xf32>
    %14 = arith.negf %13 : vector<8x128xf32>
    %15 = math.exp %14 : vector<8x128xf32>
    %cst_8 = arith.constant 1.000000e+00 : f32
    %16 = vector.broadcast %cst_8 : f32 to vector<8x128xf32>
    %17 = arith.addf %16, %15 : vector<8x128xf32>
    %18 = arith.divf %16, %17 : vector<8x128xf32>
    %19 = vector.extract_strided_slice %13 {offsets = [0, 64], sizes = [8, 32], strides = [1, 1]} : vector<8x128xf32> to vector<8x32xf32>
    %20 = math.tanh %19 : vector<8x32xf32>
    %21 = vector.extract_strided_slice %18 {offsets = [0, 0], sizes = [8, 32], strides = [1, 1]} : vector<8x128xf32> to vector<8x32xf32>
    %22 = vector.extract_strided_slice %18 {offsets = [0, 32], sizes = [8, 32], strides = [1, 1]} : vector<8x128xf32> to vector<8x32xf32>
    %23 = vector.extract_strided_slice %18 {offsets = [0, 96], sizes = [8, 32], strides = [1, 1]} : vector<8x128xf32> to vector<8x32xf32>
    %24 = arith.mulf %22, %9 : vector<8x32xf32>
    %25 = arith.mulf %21, %20 : vector<8x32xf32>
    %26 = arith.addf %24, %25 : vector<8x32xf32>
    %27 = math.tanh %26 : vector<8x32xf32>
    %28 = arith.mulf %23, %27 : vector<8x32xf32>
    %29 = vector.extract_strided_slice %7 {offsets = [8, 0], sizes = [8, 128], strides = [1, 1]} : vector<64x128xf32> to vector<8x128xf32>
    %c0_9 = arith.constant 0 : index
    %c0_10 = arith.constant 0 : index
    %30 = vector.load %arg2[%c0_9, %c0_10] : memref<32x128xf32, #tpu.memory_space<vmem>>, vector<32x128xf32>
    %cst_11 = arith.constant dense<0.000000e+00> : vector<8x128xf32>
    %31 = tpu.matmul %28, %30, %cst_11 {dimension_numbers = #tpu.dot_dimension_numbers<[1], [0], [0], [1], [0, 0, 1, 1], [], []>} : vector<8x32xf32>, vector<32x128xf32>, vector<8x128xf32> -> vector<8x128xf32>
    %32 = arith.addf %29, %31 : vector<8x128xf32>
    %33 = arith.negf %32 : vector<8x128xf32>
    %34 = math.exp %33 : vector<8x128xf32>
    %cst_12 = arith.constant 1.000000e+00 : f32
    %35 = vector.broadcast %cst_12 : f32 to vector<8x128xf32>
    %36 = arith.addf %35, %34 : vector<8x128xf32>
    %37 = arith.divf %35, %36 : vector<8x128xf32>
    %38 = vector.extract_strided_slice %32 {offsets = [0, 64], sizes = [8, 32], strides = [1, 1]} : vector<8x128xf32> to vector<8x32xf32>
    %39 = math.tanh %38 : vector<8x32xf32>
    %40 = vector.extract_strided_slice %37 {offsets = [0, 0], sizes = [8, 32], strides = [1, 1]} : vector<8x128xf32> to vector<8x32xf32>
    %41 = vector.extract_strided_slice %37 {offsets = [0, 32], sizes = [8, 32], strides = [1, 1]} : vector<8x128xf32> to vector<8x32xf32>
    %42 = vector.extract_strided_slice %37 {offsets = [0, 96], sizes = [8, 32], strides = [1, 1]} : vector<8x128xf32> to vector<8x32xf32>
    %43 = arith.mulf %41, %26 : vector<8x32xf32>
    %44 = arith.mulf %40, %39 : vector<8x32xf32>
    %45 = arith.addf %43, %44 : vector<8x32xf32>
    %46 = math.tanh %45 : vector<8x32xf32>
    %47 = arith.mulf %42, %46 : vector<8x32xf32>
    %48 = vector.extract_strided_slice %7 {offsets = [16, 0], sizes = [8, 128], strides = [1, 1]} : vector<64x128xf32> to vector<8x128xf32>
    %c0_13 = arith.constant 0 : index
    %c0_14 = arith.constant 0 : index
    %49 = vector.load %arg2[%c0_13, %c0_14] : memref<32x128xf32, #tpu.memory_space<vmem>>, vector<32x128xf32>
    %cst_15 = arith.constant dense<0.000000e+00> : vector<8x128xf32>
    %50 = tpu.matmul %47, %49, %cst_15 {dimension_numbers = #tpu.dot_dimension_numbers<[1], [0], [0], [1], [0, 0, 1, 1], [], []>} : vector<8x32xf32>, vector<32x128xf32>, vector<8x128xf32> -> vector<8x128xf32>
    %51 = arith.addf %48, %50 : vector<8x128xf32>
    %52 = arith.negf %51 : vector<8x128xf32>
    %53 = math.exp %52 : vector<8x128xf32>
    %cst_16 = arith.constant 1.000000e+00 : f32
    %54 = vector.broadcast %cst_16 : f32 to vector<8x128xf32>
    %55 = arith.addf %54, %53 : vector<8x128xf32>
    %56 = arith.divf %54, %55 : vector<8x128xf32>
    %57 = vector.extract_strided_slice %51 {offsets = [0, 64], sizes = [8, 32], strides = [1, 1]} : vector<8x128xf32> to vector<8x32xf32>
    %58 = math.tanh %57 : vector<8x32xf32>
    %59 = vector.extract_strided_slice %56 {offsets = [0, 0], sizes = [8, 32], strides = [1, 1]} : vector<8x128xf32> to vector<8x32xf32>
    %60 = vector.extract_strided_slice %56 {offsets = [0, 32], sizes = [8, 32], strides = [1, 1]} : vector<8x128xf32> to vector<8x32xf32>
    %61 = vector.extract_strided_slice %56 {offsets = [0, 96], sizes = [8, 32], strides = [1, 1]} : vector<8x128xf32> to vector<8x32xf32>
    %62 = arith.mulf %60, %45 : vector<8x32xf32>
    %63 = arith.mulf %59, %58 : vector<8x32xf32>
    %64 = arith.addf %62, %63 : vector<8x32xf32>
    %65 = math.tanh %64 : vector<8x32xf32>
    %66 = arith.mulf %61, %65 : vector<8x32xf32>
    %67 = vector.extract_strided_slice %7 {offsets = [24, 0], sizes = [8, 128], strides = [1, 1]} : vector<64x128xf32> to vector<8x128xf32>
    %c0_17 = arith.constant 0 : index
    %c0_18 = arith.constant 0 : index
    %68 = vector.load %arg2[%c0_17, %c0_18] : memref<32x128xf32, #tpu.memory_space<vmem>>, vector<32x128xf32>
    %cst_19 = arith.constant dense<0.000000e+00> : vector<8x128xf32>
    %69 = tpu.matmul %66, %68, %cst_19 {dimension_numbers = #tpu.dot_dimension_numbers<[1], [0], [0], [1], [0, 0, 1, 1], [], []>} : vector<8x32xf32>, vector<32x128xf32>, vector<8x128xf32> -> vector<8x128xf32>
    %70 = arith.addf %67, %69 : vector<8x128xf32>
    %71 = arith.negf %70 : vector<8x128xf32>
    %72 = math.exp %71 : vector<8x128xf32>
    %cst_20 = arith.constant 1.000000e+00 : f32
    %73 = vector.broadcast %cst_20 : f32 to vector<8x128xf32>
    %74 = arith.addf %73, %72 : vector<8x128xf32>
    %75 = arith.divf %73, %74 : vector<8x128xf32>
    %76 = vector.extract_strided_slice %70 {offsets = [0, 64], sizes = [8, 32], strides = [1, 1]} : vector<8x128xf32> to vector<8x32xf32>
    %77 = math.tanh %76 : vector<8x32xf32>
    %78 = vector.extract_strided_slice %75 {offsets = [0, 0], sizes = [8, 32], strides = [1, 1]} : vector<8x128xf32> to vector<8x32xf32>
    %79 = vector.extract_strided_slice %75 {offsets = [0, 32], sizes = [8, 32], strides = [1, 1]} : vector<8x128xf32> to vector<8x32xf32>
    %80 = vector.extract_strided_slice %75 {offsets = [0, 96], sizes = [8, 32], strides = [1, 1]} : vector<8x128xf32> to vector<8x32xf32>
    %81 = arith.mulf %79, %64 : vector<8x32xf32>
    %82 = arith.mulf %78, %77 : vector<8x32xf32>
    %83 = arith.addf %81, %82 : vector<8x32xf32>
    %84 = math.tanh %83 : vector<8x32xf32>
    %85 = arith.mulf %80, %84 : vector<8x32xf32>
    %86 = vector.extract_strided_slice %7 {offsets = [32, 0], sizes = [8, 128], strides = [1, 1]} : vector<64x128xf32> to vector<8x128xf32>
    %c0_21 = arith.constant 0 : index
    %c0_22 = arith.constant 0 : index
    %87 = vector.load %arg2[%c0_21, %c0_22] : memref<32x128xf32, #tpu.memory_space<vmem>>, vector<32x128xf32>
    %cst_23 = arith.constant dense<0.000000e+00> : vector<8x128xf32>
    %88 = tpu.matmul %85, %87, %cst_23 {dimension_numbers = #tpu.dot_dimension_numbers<[1], [0], [0], [1], [0, 0, 1, 1], [], []>} : vector<8x32xf32>, vector<32x128xf32>, vector<8x128xf32> -> vector<8x128xf32>
    %89 = arith.addf %86, %88 : vector<8x128xf32>
    %90 = arith.negf %89 : vector<8x128xf32>
    %91 = math.exp %90 : vector<8x128xf32>
    %cst_24 = arith.constant 1.000000e+00 : f32
    %92 = vector.broadcast %cst_24 : f32 to vector<8x128xf32>
    %93 = arith.addf %92, %91 : vector<8x128xf32>
    %94 = arith.divf %92, %93 : vector<8x128xf32>
    %95 = vector.extract_strided_slice %89 {offsets = [0, 64], sizes = [8, 32], strides = [1, 1]} : vector<8x128xf32> to vector<8x32xf32>
    %96 = math.tanh %95 : vector<8x32xf32>
    %97 = vector.extract_strided_slice %94 {offsets = [0, 0], sizes = [8, 32], strides = [1, 1]} : vector<8x128xf32> to vector<8x32xf32>
    %98 = vector.extract_strided_slice %94 {offsets = [0, 32], sizes = [8, 32], strides = [1, 1]} : vector<8x128xf32> to vector<8x32xf32>
    %99 = vector.extract_strided_slice %94 {offsets = [0, 96], sizes = [8, 32], strides = [1, 1]} : vector<8x128xf32> to vector<8x32xf32>
    %100 = arith.mulf %98, %83 : vector<8x32xf32>
    %101 = arith.mulf %97, %96 : vector<8x32xf32>
    %102 = arith.addf %100, %101 : vector<8x32xf32>
    %103 = math.tanh %102 : vector<8x32xf32>
    %104 = arith.mulf %99, %103 : vector<8x32xf32>
    %105 = vector.extract_strided_slice %7 {offsets = [40, 0], sizes = [8, 128], strides = [1, 1]} : vector<64x128xf32> to vector<8x128xf32>
    %c0_25 = arith.constant 0 : index
    %c0_26 = arith.constant 0 : index
    %106 = vector.load %arg2[%c0_25, %c0_26] : memref<32x128xf32, #tpu.memory_space<vmem>>, vector<32x128xf32>
    %cst_27 = arith.constant dense<0.000000e+00> : vector<8x128xf32>
    %107 = tpu.matmul %104, %106, %cst_27 {dimension_numbers = #tpu.dot_dimension_numbers<[1], [0], [0], [1], [0, 0, 1, 1], [], []>} : vector<8x32xf32>, vector<32x128xf32>, vector<8x128xf32> -> vector<8x128xf32>
    %108 = arith.addf %105, %107 : vector<8x128xf32>
    %109 = arith.negf %108 : vector<8x128xf32>
    %110 = math.exp %109 : vector<8x128xf32>
    %cst_28 = arith.constant 1.000000e+00 : f32
    %111 = vector.broadcast %cst_28 : f32 to vector<8x128xf32>
    %112 = arith.addf %111, %110 : vector<8x128xf32>
    %113 = arith.divf %111, %112 : vector<8x128xf32>
    %114 = vector.extract_strided_slice %108 {offsets = [0, 64], sizes = [8, 32], strides = [1, 1]} : vector<8x128xf32> to vector<8x32xf32>
    %115 = math.tanh %114 : vector<8x32xf32>
    %116 = vector.extract_strided_slice %113 {offsets = [0, 0], sizes = [8, 32], strides = [1, 1]} : vector<8x128xf32> to vector<8x32xf32>
    %117 = vector.extract_strided_slice %113 {offsets = [0, 32], sizes = [8, 32], strides = [1, 1]} : vector<8x128xf32> to vector<8x32xf32>
    %118 = vector.extract_strided_slice %113 {offsets = [0, 96], sizes = [8, 32], strides = [1, 1]} : vector<8x128xf32> to vector<8x32xf32>
    %119 = arith.mulf %117, %102 : vector<8x32xf32>
    %120 = arith.mulf %116, %115 : vector<8x32xf32>
    %121 = arith.addf %119, %120 : vector<8x32xf32>
    %122 = math.tanh %121 : vector<8x32xf32>
    %123 = arith.mulf %118, %122 : vector<8x32xf32>
    %124 = vector.extract_strided_slice %7 {offsets = [48, 0], sizes = [8, 128], strides = [1, 1]} : vector<64x128xf32> to vector<8x128xf32>
    %c0_29 = arith.constant 0 : index
    %c0_30 = arith.constant 0 : index
    %125 = vector.load %arg2[%c0_29, %c0_30] : memref<32x128xf32, #tpu.memory_space<vmem>>, vector<32x128xf32>
    %cst_31 = arith.constant dense<0.000000e+00> : vector<8x128xf32>
    %126 = tpu.matmul %123, %125, %cst_31 {dimension_numbers = #tpu.dot_dimension_numbers<[1], [0], [0], [1], [0, 0, 1, 1], [], []>} : vector<8x32xf32>, vector<32x128xf32>, vector<8x128xf32> -> vector<8x128xf32>
    %127 = arith.addf %124, %126 : vector<8x128xf32>
    %128 = arith.negf %127 : vector<8x128xf32>
    %129 = math.exp %128 : vector<8x128xf32>
    %cst_32 = arith.constant 1.000000e+00 : f32
    %130 = vector.broadcast %cst_32 : f32 to vector<8x128xf32>
    %131 = arith.addf %130, %129 : vector<8x128xf32>
    %132 = arith.divf %130, %131 : vector<8x128xf32>
    %133 = vector.extract_strided_slice %127 {offsets = [0, 64], sizes = [8, 32], strides = [1, 1]} : vector<8x128xf32> to vector<8x32xf32>
    %134 = math.tanh %133 : vector<8x32xf32>
    %135 = vector.extract_strided_slice %132 {offsets = [0, 0], sizes = [8, 32], strides = [1, 1]} : vector<8x128xf32> to vector<8x32xf32>
    %136 = vector.extract_strided_slice %132 {offsets = [0, 32], sizes = [8, 32], strides = [1, 1]} : vector<8x128xf32> to vector<8x32xf32>
    %137 = vector.extract_strided_slice %132 {offsets = [0, 96], sizes = [8, 32], strides = [1, 1]} : vector<8x128xf32> to vector<8x32xf32>
    %138 = arith.mulf %136, %121 : vector<8x32xf32>
    %139 = arith.mulf %135, %134 : vector<8x32xf32>
    %140 = arith.addf %138, %139 : vector<8x32xf32>
    %141 = math.tanh %140 : vector<8x32xf32>
    %142 = arith.mulf %137, %141 : vector<8x32xf32>
    %143 = vector.extract_strided_slice %7 {offsets = [56, 0], sizes = [8, 128], strides = [1, 1]} : vector<64x128xf32> to vector<8x128xf32>
    %c0_33 = arith.constant 0 : index
    %c0_34 = arith.constant 0 : index
    %144 = vector.load %arg2[%c0_33, %c0_34] : memref<32x128xf32, #tpu.memory_space<vmem>>, vector<32x128xf32>
    %cst_35 = arith.constant dense<0.000000e+00> : vector<8x128xf32>
    %145 = tpu.matmul %142, %144, %cst_35 {dimension_numbers = #tpu.dot_dimension_numbers<[1], [0], [0], [1], [0, 0, 1, 1], [], []>} : vector<8x32xf32>, vector<32x128xf32>, vector<8x128xf32> -> vector<8x128xf32>
    %146 = arith.addf %143, %145 : vector<8x128xf32>
    %147 = arith.negf %146 : vector<8x128xf32>
    %148 = math.exp %147 : vector<8x128xf32>
    %cst_36 = arith.constant 1.000000e+00 : f32
    %149 = vector.broadcast %cst_36 : f32 to vector<8x128xf32>
    %150 = arith.addf %149, %148 : vector<8x128xf32>
    %151 = arith.divf %149, %150 : vector<8x128xf32>
    %152 = vector.extract_strided_slice %146 {offsets = [0, 64], sizes = [8, 32], strides = [1, 1]} : vector<8x128xf32> to vector<8x32xf32>
    %153 = math.tanh %152 : vector<8x32xf32>
    %154 = vector.extract_strided_slice %151 {offsets = [0, 0], sizes = [8, 32], strides = [1, 1]} : vector<8x128xf32> to vector<8x32xf32>
    %155 = vector.extract_strided_slice %151 {offsets = [0, 32], sizes = [8, 32], strides = [1, 1]} : vector<8x128xf32> to vector<8x32xf32>
    %156 = vector.extract_strided_slice %151 {offsets = [0, 96], sizes = [8, 32], strides = [1, 1]} : vector<8x128xf32> to vector<8x32xf32>
    %157 = arith.mulf %155, %140 : vector<8x32xf32>
    %158 = arith.mulf %154, %153 : vector<8x32xf32>
    %159 = arith.addf %157, %158 : vector<8x32xf32>
    %160 = math.tanh %159 : vector<8x32xf32>
    %161 = arith.mulf %156, %160 : vector<8x32xf32>
    %c0_37 = arith.constant 0 : index
    %c0_38 = arith.constant 0 : index
    %162 = vector.load %arg3[%c0_37, %c0_38] : memref<8x32xf32, #tpu.memory_space<vmem>>, vector<8x32xf32>
    tpu.vector_store %arg3[%c0_37, %c0_38], %161 {strides = array<i32>} : memref<8x32xf32, #tpu.memory_space<vmem>>, vector<8x32xf32>,
    %c0_39 = arith.constant 0 : index
    %c0_40 = arith.constant 0 : index
    %163 = vector.load %arg4[%c0_39, %c0_40] : memref<8x32xf32, #tpu.memory_space<vmem>>, vector<8x32xf32>
    tpu.vector_store %arg4[%c0_39, %c0_40], %159 {strides = array<i32>} : memref<8x32xf32, #tpu.memory_space<vmem>>, vector<8x32xf32>,
    return
  }
}

</mosaic_0001>

<llo_original>
// kernel: tpu_custom_call.1
$region0: #{tpu_custom_call.1}
  #allocation0 [shape = 'u32[]', space=smem, size = 0x4, offset = 0x4, fixed_abs, tag = 'smem constant byte address 0x4 - core index']
  #allocation1 [shape = 'u32[144,128]{1,0:T(1,128)}', space=vmem, size = 0x12000, scoped, tag = 'internal scratch']
  %s0 = inlined_call_operand.vmem [shape: s32[64,1], index: 0, kind: input, shape index: {}]
  %s1 = inlined_call_operand.vmem [shape: f32[48,128], index: 1, kind: input, shape index: {}]
  %s2 = inlined_call_operand.hbm [shape: f32[32,128], index: 2, kind: input, shape index: {}]
  %s3 = inlined_call_operand.hbm [shape: f32[8,32], index: 3, kind: output, shape index: {0}]
  %s4 = inlined_call_operand.hbm [shape: f32[8,32], index: 4, kind: output, shape index: {1}]
  %5 = xla_tuple %s3, %s4
  %s6 = sld [smem:[#allocation0]]
  $region34: #{tpu_custom_call.1} parent=0
    _
  %s8 = ssub.s32 1, %s6
  %s9 = scalar_select 0, %s8, %s6
  $region1: #{tpu_custom_call.1} parent=0
    #allocation2 [shape = 'u8[16384]{0}', space=vmem, size = 0x4000, scoped, tag = 'input window, operand 2, single buffered']
    #allocation3 [shape = 's32[1]{0}', space=sflag, size = 0x4, scoped, tag = 'scoped memory for tpu_custom_call.1']
    #allocation4 [shape = 's32[1]{0}', space=sflag, size = 0x4, scoped, tag = 'scoped memory for tpu_custom_call.1']
    #allocation5 [shape = 'u8[4096]{0}', space=vmem, size = 0x1000, scoped, tag = 'output window, operand 0, single buffered']
    #allocation6 [shape = 'u8[4096]{0}', space=vmem, size = 0x1000, scoped, tag = 'output window, operand 1, single buffered']
    #allocation7 [shape = 's32[1]{0}', space=sflag, size = 0x4, scoped, tag = 'scoped memory for tpu_custom_call.1']
    %10 = vsyncpa [#allocation3], 0
    %11 = vsyncpa [#allocation4], 0
    %12 = vsyncpa [#allocation7], 0
    // Predicated region
    $region2: #{tpu_custom_call.1} parent=1 // pred_check
      _
    $region3: #{tpu_custom_call.1} parent=1 // pred_check_branch
      %14 = sbr.rel (0) target = $region5
    $region4: #{tpu_custom_call.1} parent=1 // pred_region
      _
    $region5: #{tpu_custom_call.1} parent=1 // pred_fallthru
      _
    // Predicated region
    $region6: #{tpu_custom_call.1} parent=1 // pred_check
      _
    $region7: #{tpu_custom_call.1} parent=1 // pred_check_branch
      %16 = sbr.rel (0) target = $region9
    $region8: #{tpu_custom_call.1} parent=1 // pred_region
      _
    $region9: #{tpu_custom_call.1} parent=1 // pred_fallthru
      _
    // Predicated region
    $region10: #{tpu_custom_call.1} parent=1 // pred_check
      _
    $region11: #{tpu_custom_call.1} parent=1 // pred_check_branch
      %18 = sbr.rel (0) target = $region13
    $region12: #{tpu_custom_call.1} parent=1 // pred_region
      %s20 = ssub.s32 512, 512
      %21 = vsyncadd [#allocation3], %s20
      %s22 = sshll.u32 [#allocation2], 4
      %s23 = int_to_ptr.vmem [resolvable:$true] %s22
      %28 = dma.hbm_to_vmem [thread:$0]  %s2, 512, %s23, [#allocation3], 128, 128, 8
    $region13: #{tpu_custom_call.1} parent=1 // pred_fallthru
      _
    // Predicated region
    $region14: #{tpu_custom_call.1} parent=1 // pred_check
      _
    $region15: #{tpu_custom_call.1} parent=1 // pred_check_branch
      %30 = sbr.rel (0) target = $region17
    $region16: #{tpu_custom_call.1} parent=1 // pred_region
      %31 = dma.done [#allocation3], 512
    $region17: #{tpu_custom_call.1} parent=1 // pred_fallthru
      _
    %v32 = vlaneseq
    %v33 = vand.u32 %v32, 127
    %v34 = vld [vmem:[%s0] sm:$0xff]
    %v35 = vld [vmem:[%s0 + $0x8] sm:$0xff]
    %v36 = vld [vmem:[%s0 + $0x10] sm:$0xff]
    %v37 = vld [vmem:[%s0 + $0x18] sm:$0xff]
    %v38 = vld [vmem:[%s0 + $0x20] sm:$0xff]
    %v39 = vld [vmem:[%s0 + $0x28] sm:$0xff]
    %v40 = vld [vmem:[%s0 + $0x30] sm:$0xff]
    %v41 = vld [vmem:[%s0 + $0x38] sm:$0xff]
    %42 = vset.pattern.permute.xlu0 0
    %43 = vperm.xlu0 %42, %v34
    %v44 = vpop.permute.xlu0 %43
    %45 = vset.pattern.permute.xlu0 0
    %46 = vperm.xlu0 %45, %v35
    %v47 = vpop.permute.xlu0 %46
    %48 = vset.pattern.permute.xlu0 0
    %49 = vperm.xlu0 %48, %v36
    %v50 = vpop.permute.xlu0 %49
    %51 = vset.pattern.permute.xlu0 0
    %52 = vperm.xlu0 %51, %v37
    %v53 = vpop.permute.xlu0 %52
    %54 = vset.pattern.permute.xlu0 0
    %55 = vperm.xlu0 %54, %v38
    %v56 = vpop.permute.xlu0 %55
    %57 = vset.pattern.permute.xlu0 0
    %58 = vperm.xlu0 %57, %v39
    %v59 = vpop.permute.xlu0 %58
    %60 = vset.pattern.permute.xlu0 0
    %61 = vperm.xlu0 %60, %v40
    %v62 = vpop.permute.xlu0 %61
    %63 = vset.pattern.permute.xlu0 0
    %64 = vperm.xlu0 %63, %v41
    %v65 = vpop.permute.xlu0 %64
    %vm66 = vcmp.eq.s32.totalorder %v33, %v44
    %vm67 = vcmp.eq.s32.totalorder %v33, %v47
    %vm68 = vcmp.eq.s32.totalorder %v33, %v50
    %vm69 = vcmp.eq.s32.totalorder %v33, %v53
    %vm70 = vcmp.eq.s32.totalorder %v33, %v56
    %vm71 = vcmp.eq.s32.totalorder %v33, %v59
    %vm72 = vcmp.eq.s32.totalorder %v33, %v62
    %vm73 = vcmp.eq.s32.totalorder %v33, %v65
    %v74 = vsel %vm66, 1, 0
    %v75 = vsel %vm67, 1, 0
    %v76 = vsel %vm68, 1, 0
    %v77 = vsel %vm69, 1, 0
    %v78 = vsel %vm70, 1, 0
    %v79 = vsel %vm71, 1, 0
    %v80 = vsel %vm72, 1, 0
    %v81 = vsel %vm73, 1, 0
    %v82 = vcvt.s32.f32 %v74
    %v83 = vcvt.s32.f32 %v75
    %v84 = vcvt.s32.f32 %v76
    %v85 = vcvt.s32.f32 %v77
    %v86 = vcvt.s32.f32 %v78
    %v87 = vcvt.s32.f32 %v79
    %v88 = vcvt.s32.f32 %v80
    %v89 = vcvt.s32.f32 %v81
    %v90 = vld [vmem:[%s1] sm:$0xff]
    %v91 = vld [vmem:[%s1 + $0x8] sm:$0xff]
    %v92 = vld [vmem:[%s1 + $0x10] sm:$0xff]
    %v93 = vld [vmem:[%s1 + $0x18] sm:$0xff]
    %v94 = vld [vmem:[%s1 + $0x20] sm:$0xff]
    %v95 = vld [vmem:[%s1 + $0x28] sm:$0xff]
    %vm96 = vcmask 392192
    %v98 = vsel %vm96, %v82, 0
    %v101 = vsel %vm96, %v83, 0
    %v104 = vsel %vm96, %v84, 0
    %v107 = vsel %vm96, %v85, 0
    %v110 = vsel %vm96, %v86, 0
    %v113 = vsel %vm96, %v87, 0
    %v116 = vsel %vm96, %v88, 0
    %v119 = vsel %vm96, %v89, 0
    %121 = vmatprep.subr.mxu0 0.0
    %122 = vmatpush1.msra.mxu0 %v90
    %123 = vmatprep.subr.mxu0 0.0
    %124 = vmatpush1.msra.mxu0 %v91
    %125 = vmatprep.subr.mxu0 0.0
    %126 = vmatpush1.msra.mxu0 %v92
    %127 = vmatprep.subr.mxu0 0.0
    %128 = vmatpush1.msra.mxu0 %v93
    %129 = vmatprep.subr.mxu0 0.0
    %130 = vmatpush1.msra.mxu0 %v94
    %131 = vmatprep.subr.mxu0 0.0
    %132 = vmatpush1.msra.mxu0 %v95
    %133 = vmatprep.subr.mxu0 0.0
    %134 = vmatpush1.msra.mxu0 0.0
    %135 = vmatprep.subr.mxu0 0.0
    %136 = vmatpush1.msra.mxu0 0.0
    %137 = vmatprep.subr.mxu0 0.0
    %138 = vmatpush1.msra.mxu0 0.0
    %139 = vmatprep.subr.mxu0 0.0
    %140 = vmatpush1.msra.mxu0 0.0
    %141 = vmatprep.subr.mxu0 0.0
    %142 = vmatpush1.msra.mxu0 0.0
    %143 = vmatprep.subr.mxu0 0.0
    %144 = vmatpush1.msra.mxu0 0.0
    %145 = vmatprep.subr.mxu0 0.0
    %146 = vmatpush1.msra.mxu0 0.0
    %147 = vmatprep.subr.mxu0 0.0
    %148 = vmatpush1.msra.mxu0 0.0
    %149 = vmatprep.subr.mxu0 0.0
    %150 = vmatpush1.msra.mxu0 0.0
    %151 = vmatprep.subr.mxu0 0.0
    %152 = vmatpush1.msra.mxu0 0.0
    %153 = vmatprep.subr.mxu0 0.0
    %154 = vmatpush1.msra.mxu0 0.0
    %155 = vmatprep.subr.mxu0 0.0
    %156 = vmatpush1.msra.mxu0 0.0
    %157 = vmatprep.subr.mxu0 0.0
    %158 = vmatpush1.msra.mxu0 0.0
    %159 = vmatprep.subr.mxu0 0.0
    %160 = vmatpush1.msra.mxu0 0.0
    %161 = vmatprep.subr.mxu0 0.0
    %162 = vmatpush1.msra.mxu0 0.0
    %163 = vmatprep.subr.mxu0 0.0
    %164 = vmatpush1.msra.mxu0 0.0
    %165 = vmatprep.subr.mxu0 0.0
    %166 = vmatpush1.msra.mxu0 0.0
    %167 = vmatprep.subr.mxu0 0.0
    %168 = vmatpush1.msra.mxu0 0.0
    %169 = vmatprep.subr.mxu0 0.0
    %170 = vmatpush1.msra.mxu0 0.0
    %171 = vmatprep.subr.mxu0 0.0
    %172 = vmatpush1.msra.mxu0 0.0
    %173 = vmatprep.subr.mxu0 0.0
    %174 = vmatpush1.msra.mxu0 0.0
    %175 = vmatprep.subr.mxu0 0.0
    %176 = vmatpush1.msra.mxu0 0.0
    %177 = vmatprep.subr.mxu0 0.0
    %178 = vmatpush1.msra.mxu0 0.0
    %179 = vmatprep.subr.mxu0 0.0
    %180 = vmatpush1.msra.mxu0 0.0
    %181 = vmatprep.subr.mxu0 0.0
    %182 = vmatpush1.msra.mxu0 0.0
    %183 = vmatprep.subr.mxu0 0.0
    %184 = vmatpush1.msra.mxu0 0.0
    %185 = vmatprep.mubr.f32.mxu0 0.0
    %186 = vmatmul.mubr.f32.gmra.mrb[0].mxu0 %v98
    %v187 = vpop.f32.mrb[0].mxu0
    %v188 = vadd.f32 0.0, %v187
    %v189 = vpop.f32.mrb[0].mxu0
    %190 = vmatprep.mubr.f32.mxu0 0.0
    %191 = vmatmul.mubr.f32.gmra.mrb[0].mxu0 %v101
    %v192 = vpop.f32.mrb[0].mxu0
    %v193 = vadd.f32 0.0, %v192
    %v194 = vpop.f32.mrb[0].mxu0
    %195 = vmatprep.mubr.f32.mxu0 0.0
    %196 = vmatmul.mubr.f32.gmra.mrb[0].mxu0 %v104
    %v197 = vpop.f32.mrb[0].mxu0
    %v198 = vadd.f32 0.0, %v197
    %v199 = vpop.f32.mrb[0].mxu0
    %200 = vmatprep.mubr.f32.mxu0 0.0
    %201 = vmatmul.mubr.f32.gmra.mrb[0].mxu0 %v107
    %v202 = vpop.f32.mrb[0].mxu0
    %v203 = vadd.f32 0.0, %v202
    %v204 = vpop.f32.mrb[0].mxu0
    %205 = vmatprep.mubr.f32.mxu0 0.0
    %206 = vmatmul.mubr.f32.gmra.mrb[0].mxu0 %v110
    %v207 = vpop.f32.mrb[0].mxu0
    %v208 = vadd.f32 0.0, %v207
    %v209 = vpop.f32.mrb[0].mxu0
    %210 = vmatprep.mubr.f32.mxu0 0.0
    %211 = vmatmul.mubr.f32.gmra.mrb[0].mxu0 %v113
    %v212 = vpop.f32.mrb[0].mxu0
    %v213 = vadd.f32 0.0, %v212
    %v214 = vpop.f32.mrb[0].mxu0
    %215 = vmatprep.mubr.f32.mxu0 0.0
    %216 = vmatmul.mubr.f32.gmra.mrb[0].mxu0 %v116
    %v217 = vpop.f32.mrb[0].mxu0
    %v218 = vadd.f32 0.0, %v217
    %v219 = vpop.f32.mrb[0].mxu0
    %220 = vmatprep.mubr.f32.mxu0 0.0
    %221 = vmatmul.mubr.f32.gmra.mrb[0].mxu0 %v119
    %v222 = vpop.f32.mrb[0].mxu0
    %v223 = vadd.f32 0.0, %v222
    %v224 = vpop.f32.mrb[0].mxu0
    %225 = vdwg.mxu0
    %v226 = vld [vmem:[#allocation2] sm:$0xff]
    %v227 = vld [vmem:[#allocation2 + $0x8] sm:$0xff]
    %v228 = vld [vmem:[#allocation2 + $0x10] sm:$0xff]
    %v229 = vld [vmem:[#allocation2 + $0x18] sm:$0xff]
    %vm230 = vcmask 261120
    %v232 = vsel %vm230, 0.0, 0
    %234 = vmatprep.subr.mxu0 0.0
    %235 = vmatpush1.msra.mxu0 %v226
    %236 = vmatprep.subr.mxu0 0.0
    %237 = vmatpush1.msra.mxu0 %v227
    %238 = vmatprep.subr.mxu0 0.0
    %239 = vmatpush1.msra.mxu0 %v228
    %240 = vmatprep.subr.mxu0 0.0
    %241 = vmatpush1.msra.mxu0 %v229
    %242 = vmatprep.subr.mxu0 0.0
    %243 = vmatpush1.msra.mxu0 0.0
    %244 = vmatprep.subr.mxu0 0.0
    %245 = vmatpush1.msra.mxu0 0.0
    %246 = vmatprep.subr.mxu0 0.0
    %247 = vmatpush1.msra.mxu0 0.0
    %248 = vmatprep.subr.mxu0 0.0
    %249 = vmatpush1.msra.mxu0 0.0
    %250 = vmatprep.subr.mxu0 0.0
    %251 = vmatpush1.msra.mxu0 0.0
    %252 = vmatprep.subr.mxu0 0.0
    %253 = vmatpush1.msra.mxu0 0.0
    %254 = vmatprep.subr.mxu0 0.0
    %255 = vmatpush1.msra.mxu0 0.0
    %256 = vmatprep.subr.mxu0 0.0
    %257 = vmatpush1.msra.mxu0 0.0
    %258 = vmatprep.subr.mxu0 0.0
    %259 = vmatpush1.msra.mxu0 0.0
    %260 = vmatprep.subr.mxu0 0.0
    %261 = vmatpush1.msra.mxu0 0.0
    %262 = vmatprep.subr.mxu0 0.0
    %263 = vmatpush1.msra.mxu0 0.0
    %264 = vmatprep.subr.mxu0 0.0
    %265 = vmatpush1.msra.mxu0 0.0
    %266 = vmatprep.subr.mxu0 0.0
    %267 = vmatpush1.msra.mxu0 0.0
    %268 = vmatprep.subr.mxu0 0.0
    %269 = vmatpush1.msra.mxu0 0.0
    %270 = vmatprep.subr.mxu0 0.0
    %271 = vmatpush1.msra.mxu0 0.0
    %272 = vmatprep.subr.mxu0 0.0
    %273 = vmatpush1.msra.mxu0 0.0
    %274 = vmatprep.subr.mxu0 0.0
    %275 = vmatpush1.msra.mxu0 0.0
    %276 = vmatprep.subr.mxu0 0.0
    %277 = vmatpush1.msra.mxu0 0.0
    %278 = vmatprep.subr.mxu0 0.0
    %279 = vmatpush1.msra.mxu0 0.0
    %280 = vmatprep.subr.mxu0 0.0
    %281 = vmatpush1.msra.mxu0 0.0
    %282 = vmatprep.subr.mxu0 0.0
    %283 = vmatpush1.msra.mxu0 0.0
    %284 = vmatprep.subr.mxu0 0.0
    %285 = vmatpush1.msra.mxu0 0.0
    %286 = vmatprep.subr.mxu0 0.0
    %287 = vmatpush1.msra.mxu0 0.0
    %288 = vmatprep.subr.mxu0 0.0
    %289 = vmatpush1.msra.mxu0 0.0
    %290 = vmatprep.subr.mxu0 0.0
    %291 = vmatpush1.msra.mxu0 0.0
    %292 = vmatprep.subr.mxu0 0.0
    %293 = vmatpush1.msra.mxu0 0.0
    %294 = vmatprep.subr.mxu0 0.0
    %295 = vmatpush1.msra.mxu0 0.0
    %296 = vmatprep.subr.mxu0 0.0
    %297 = vmatpush1.msra.mxu0 0.0
    %298 = vmatprep.mubr.f32.mxu0 0.0
    %299 = vmatmul.mubr.f32.gmra.mrb[0].mxu0 %v232
    %v300 = vpop.f32.mrb[0].mxu0
    %v301 = vadd.f32 0.0, %v300
    %v302 = vpop.f32.mrb[0].mxu0
    %303 = vdwg.mxu0
    %v304 = vadd.f32 %v188, %v301
    %v305 = vxor.u32 %v304, 2147483648
    %v306 = vmul.f32 %v305, 1.442695
    %v307 = vpow.pop %v306
    %v308 = vadd.f32 %v307, 1.0
    %v309 = vrcp.pop %v308
    %v310 = vmul.f32 1.0, %v309
    %v311 = vtanh.pop %v304
    %v312 = vmul.f32 %v310, 0.0
    %314 = vrot.lane.b32.xlu0 %v311, 64
    %v315 = vpop.permute.xlu0 %314
    %v317 = vmul.f32 %v310, %v315
    %319 = vrot.lane.b32.xlu0 %v317, 32
    %v320 = vpop.permute.xlu0 %319
    %v322 = vadd.f32 %v312, %v320
    %v323 = vtanh.pop %v322
    %325 = vrot.lane.b32.xlu0 %v323, 64
    %v326 = vpop.permute.xlu0 %325
    %v328 = vmul.f32 %v310, %v326
    %330 = vrot.lane.b32.xlu0 %v328, 32
    %v331 = vpop.permute.xlu0 %330
    %v332 = vsel %vm230, %v331, 0
    %334 = vmatprep.subr.mxu0 0.0
    %335 = vmatpush1.msra.mxu0 %v226
    %336 = vmatprep.subr.mxu0 0.0
    %337 = vmatpush1.msra.mxu0 %v227
    %338 = vmatprep.subr.mxu0 0.0
    %339 = vmatpush1.msra.mxu0 %v228
    %340 = vmatprep.subr.mxu0 0.0
    %341 = vmatpush1.msra.mxu0 %v229
    %342 = vmatprep.subr.mxu0 0.0
    %343 = vmatpush1.msra.mxu0 0.0
    %344 = vmatprep.subr.mxu0 0.0
    %345 = vmatpush1.msra.mxu0 0.0
    %346 = vmatprep.subr.mxu0 0.0
    %347 = vmatpush1.msra.mxu0 0.0
    %348 = vmatprep.subr.mxu0 0.0
    %349 = vmatpush1.msra.mxu0 0.0
    %350 = vmatprep.subr.mxu0 0.0
    %351 = vmatpush1.msra.mxu0 0.0
    %352 = vmatprep.subr.mxu0 0.0
    %353 = vmatpush1.msra.mxu0 0.0
    %354 = vmatprep.subr.mxu0 0.0
    %355 = vmatpush1.msra.mxu0 0.0
    %356 = vmatprep.subr.mxu0 0.0
    %357 = vmatpush1.msra.mxu0 0.0
    %358 = vmatprep.subr.mxu0 0.0
    %359 = vmatpush1.msra.mxu0 0.0
    %360 = vmatprep.subr.mxu0 0.0
    %361 = vmatpush1.msra.mxu0 0.0
    %362 = vmatprep.subr.mxu0 0.0
    %363 = vmatpush1.msra.mxu0 0.0
    %364 = vmatprep.subr.mxu0 0.0
    %365 = vmatpush1.msra.mxu0 0.0
    %366 = vmatprep.subr.mxu0 0.0
    %367 = vmatpush1.msra.mxu0 0.0
    %368 = vmatprep.subr.mxu0 0.0
    %369 = vmatpush1.msra.mxu0 0.0
    %370 = vmatprep.subr.mxu0 0.0
    %371 = vmatpush1.msra.mxu0 0.0
    %372 = vmatprep.subr.mxu0 0.0
    %373 = vmatpush1.msra.mxu0 0.0
    %374 = vmatprep.subr.mxu0 0.0
    %375 = vmatpush1.msra.mxu0 0.0
    %376 = vmatprep.subr.mxu0 0.0
    %377 = vmatpush1.msra.mxu0 0.0
    %378 = vmatprep.subr.mxu0 0.0
    %379 = vmatpush1.msra.mxu0 0.0
    %380 = vmatprep.subr.mxu0 0.0
    %381 = vmatpush1.msra.mxu0 0.0
    %382 = vmatprep.subr.mxu0 0.0
    %383 = vmatpush1.msra.mxu0 0.0
    %384 = vmatprep.subr.mxu0 0.0
    %385 = vmatpush1.msra.mxu0 0.0
    %386 = vmatprep.subr.mxu0 0.0
    %387 = vmatpush1.msra.mxu0 0.0
    %388 = vmatprep.subr.mxu0 0.0
    %389 = vmatpush1.msra.mxu0 0.0
    %390 = vmatprep.subr.mxu0 0.0
    %391 = vmatpush1.msra.mxu0 0.0
    %392 = vmatprep.subr.mxu0 0.0
    %393 = vmatpush1.msra.mxu0 0.0
    %394 = vmatprep.subr.mxu0 0.0
    %395 = vmatpush1.msra.mxu0 0.0
    %396 = vmatprep.subr.mxu0 0.0
    %397 = vmatpush1.msra.mxu0 0.0
    %398 = vmatprep.mubr.f32.mxu0 0.0
    %399 = vmatmul.mubr.f32.gmra.mrb[0].mxu0 %v332
    %v400 = vpop.f32.mrb[0].mxu0
    %v401 = vadd.f32 0.0, %v400
    %v402 = vpop.f32.mrb[0].mxu0
    %403 = vdwg.mxu0
    %v404 = vadd.f32 %v193, %v401
    %v405 = vxor.u32 %v404, 2147483648
    %v406 = vmul.f32 %v405, 1.442695
    %v407 = vpow.pop %v406
    %v408 = vadd.f32 %v407, 1.0
    %v409 = vrcp.pop %v408
    %v410 = vmul.f32 1.0, %v409
    %v411 = vtanh.pop %v404
    %v412 = vmul.f32 %v410, %v322
    %414 = vrot.lane.b32.xlu0 %v411, 64
    %v415 = vpop.permute.xlu0 %414
    %v417 = vmul.f32 %v410, %v415
    %419 = vrot.lane.b32.xlu0 %v417, 32
    %v420 = vpop.permute.xlu0 %419
    %v422 = vadd.f32 %v412, %v420
    %v423 = vtanh.pop %v422
    %425 = vrot.lane.b32.xlu0 %v423, 64
    %v426 = vpop.permute.xlu0 %425
    %v428 = vmul.f32 %v410, %v426
    %430 = vrot.lane.b32.xlu0 %v428, 32
    %v431 = vpop.permute.xlu0 %430
    %v432 = vsel %vm230, %v431, 0
    %434 = vmatprep.subr.mxu0 0.0
    %435 = vmatpush1.msra.mxu0 %v226
    %436 = vmatprep.subr.mxu0 0.0
    %437 = vmatpush1.msra.mxu0 %v227
    %438 = vmatprep.subr.mxu0 0.0
    %439 = vmatpush1.msra.mxu0 %v228
    %440 = vmatprep.subr.mxu0 0.0
    %441 = vmatpush1.msra.mxu0 %v229
    %442 = vmatprep.subr.mxu0 0.0
    %443 = vmatpush1.msra.mxu0 0.0
    %444 = vmatprep.subr.mxu0 0.0
    %445 = vmatpush1.msra.mxu0 0.0
    %446 = vmatprep.subr.mxu0 0.0
    %447 = vmatpush1.msra.mxu0 0.0
    %448 = vmatprep.subr.mxu0 0.0
    %449 = vmatpush1.msra.mxu0 0.0
    %450 = vmatprep.subr.mxu0 0.0
    %451 = vmatpush1.msra.mxu0 0.0
    %452 = vmatprep.subr.mxu0 0.0
    %453 = vmatpush1.msra.mxu0 0.0
    %454 = vmatprep.subr.mxu0 0.0
    %455 = vmatpush1.msra.mxu0 0.0
    %456 = vmatprep.subr.mxu0 0.0
    %457 = vmatpush1.msra.mxu0 0.0
    %458 = vmatprep.subr.mxu0 0.0
    %459 = vmatpush1.msra.mxu0 0.0
    %460 = vmatprep.subr.mxu0 0.0
    %461 = vmatpush1.msra.mxu0 0.0
    %462 = vmatprep.subr.mxu0 0.0
    %463 = vmatpush1.msra.mxu0 0.0
    %464 = vmatprep.subr.mxu0 0.0
    %465 = vmatpush1.msra.mxu0 0.0
    %466 = vmatprep.subr.mxu0 0.0
    %467 = vmatpush1.msra.mxu0 0.0
    %468 = vmatprep.subr.mxu0 0.0
    %469 = vmatpush1.msra.mxu0 0.0
    %470 = vmatprep.subr.mxu0 0.0
    %471 = vmatpush1.msra.mxu0 0.0
    %472 = vmatprep.subr.mxu0 0.0
    %473 = vmatpush1.msra.mxu0 0.0
    %474 = vmatprep.subr.mxu0 0.0
    %475 = vmatpush1.msra.mxu0 0.0
    %476 = vmatprep.subr.mxu0 0.0
    %477 = vmatpush1.msra.mxu0 0.0
    %478 = vmatprep.subr.mxu0 0.0
    %479 = vmatpush1.msra.mxu0 0.0
    %480 = vmatprep.subr.mxu0 0.0
    %481 = vmatpush1.msra.mxu0 0.0
    %482 = vmatprep.subr.mxu0 0.0
    %483 = vmatpush1.msra.mxu0 0.0
    %484 = vmatprep.subr.mxu0 0.0
    %485 = vmatpush1.msra.mxu0 0.0
    %486 = vmatprep.subr.mxu0 0.0
    %487 = vmatpush1.msra.mxu0 0.0
    %488 = vmatprep.subr.mxu0 0.0
    %489 = vmatpush1.msra.mxu0 0.0
    %490 = vmatprep.subr.mxu0 0.0
    %491 = vmatpush1.msra.mxu0 0.0
    %492 = vmatprep.subr.mxu0 0.0
    %493 = vmatpush1.msra.mxu0 0.0
    %494 = vmatprep.subr.mxu0 0.0
    %495 = vmatpush1.msra.mxu0 0.0
    %496 = vmatprep.subr.mxu0 0.0
    %497 = vmatpush1.msra.mxu0 0.0
    %498 = vmatprep.mubr.f32.mxu0 0.0
    %499 = vmatmul.mubr.f32.gmra.mrb[0].mxu0 %v432
    %v500 = vpop.f32.mrb[0].mxu0
    %v501 = vadd.f32 0.0, %v500
    %v502 = vpop.f32.mrb[0].mxu0
    %503 = vdwg.mxu0
    %v504 = vadd.f32 %v198, %v501
    %v505 = vxor.u32 %v504, 2147483648
    %v506 = vmul.f32 %v505, 1.442695
    %v507 = vpow.pop %v506
    %v508 = vadd.f32 %v507, 1.0
    %v509 = vrcp.pop %v508
    %v510 = vmul.f32 1.0, %v509
    %v511 = vtanh.pop %v504
    %v512 = vmul.f32 %v510, %v422
    %514 = vrot.lane.b32.xlu0 %v511, 64
    %v515 = vpop.permute.xlu0 %514
    %v517 = vmul.f32 %v510, %v515
    %519 = vrot.lane.b32.xlu0 %v517, 32
    %v520 = vpop.permute.xlu0 %519
    %v522 = vadd.f32 %v512, %v520
    %v523 = vtanh.pop %v522
    %525 = vrot.lane.b32.xlu0 %v523, 64
    %v526 = vpop.permute.xlu0 %525
    %v528 = vmul.f32 %v510, %v526
    %530 = vrot.lane.b32.xlu0 %v528, 32
    %v531 = vpop.permute.xlu0 %530
    %v532 = vsel %vm230, %v531, 0
    %534 = vmatprep.subr.mxu0 0.0
    %535 = vmatpush1.msra.mxu0 %v226
    %536 = vmatprep.subr.mxu0 0.0
    %537 = vmatpush1.msra.mxu0 %v227
    %538 = vmatprep.subr.mxu0 0.0
    %539 = vmatpush1.msra.mxu0 %v228
    %540 = vmatprep.subr.mxu0 0.0
    %541 = vmatpush1.msra.mxu0 %v229
    %542 = vmatprep.subr.mxu0 0.0
    %543 = vmatpush1.msra.mxu0 0.0
    %544 = vmatprep.subr.mxu0 0.0
    %545 = vmatpush1.msra.mxu0 0.0
    %546 = vmatprep.subr.mxu0 0.0
    %547 = vmatpush1.msra.mxu0 0.0
    %548 = vmatprep.subr.mxu0 0.0
    %549 = vmatpush1.msra.mxu0 0.0
    %550 = vmatprep.subr.mxu0 0.0
    %551 = vmatpush1.msra.mxu0 0.0
    %552 = vmatprep.subr.mxu0 0.0
    %553 = vmatpush1.msra.mxu0 0.0
    %554 = vmatprep.subr.mxu0 0.0
    %555 = vmatpush1.msra.mxu0 0.0
    %556 = vmatprep.subr.mxu0 0.0
    %557 = vmatpush1.msra.mxu0 0.0
    %558 = vmatprep.subr.mxu0 0.0
    %559 = vmatpush1.msra.mxu0 0.0
    %560 = vmatprep.subr.mxu0 0.0
    %561 = vmatpush1.msra.mxu0 0.0
    %562 = vmatprep.subr.mxu0 0.0
    %563 = vmatpush1.msra.mxu0 0.0
    %564 = vmatprep.subr.mxu0 0.0
    %565 = vmatpush1.msra.mxu0 0.0
    %566 = vmatprep.subr.mxu0 0.0
    %567 = vmatpush1.msra.mxu0 0.0
    %568 = vmatprep.subr.mxu0 0.0
    %569 = vmatpush1.msra.mxu0 0.0
    %570 = vmatprep.subr.mxu0 0.0
    %571 = vmatpush1.msra.mxu0 0.0
    %572 = vmatprep.subr.mxu0 0.0
    %573 = vmatpush1.msra.mxu0 0.0
    %574 = vmatprep.subr.mxu0 0.0
    %575 = vmatpush1.msra.mxu0 0.0
    %576 = vmatprep.subr.mxu0 0.0
    %577 = vmatpush1.msra.mxu0 0.0
    %578 = vmatprep.subr.mxu0 0.0
    %579 = vmatpush1.msra.mxu0 0.0
    %580 = vmatprep.subr.mxu0 0.0
    %581 = vmatpush1.msra.mxu0 0.0
    %582 = vmatprep.subr.mxu0 0.0
    %583 = vmatpush1.msra.mxu0 0.0
    %584 = vmatprep.subr.mxu0 0.0
    %585 = vmatpush1.msra.mxu0 0.0
    %586 = vmatprep.subr.mxu0 0.0
    %587 = vmatpush1.msra.mxu0 0.0
    %588 = vmatprep.subr.mxu0 0.0
    %589 = vmatpush1.msra.mxu0 0.0
    %590 = vmatprep.subr.mxu0 0.0
    %591 = vmatpush1.msra.mxu0 0.0
    %592 = vmatprep.subr.mxu0 0.0
    %593 = vmatpush1.msra.mxu0 0.0
    %594 = vmatprep.subr.mxu0 0.0
    %595 = vmatpush1.msra.mxu0 0.0
    %596 = vmatprep.subr.mxu0 0.0
    %597 = vmatpush1.msra.mxu0 0.0
    %598 = vmatprep.mubr.f32.mxu0 0.0
    %599 = vmatmul.mubr.f32.gmra.mrb[0].mxu0 %v532
    %v600 = vpop.f32.mrb[0].mxu0
    %v601 = vadd.f32 0.0, %v600
    %v602 = vpop.f32.mrb[0].mxu0
    %603 = vdwg.mxu0
    %v604 = vadd.f32 %v203, %v601
    %v605 = vxor.u32 %v604, 2147483648
    %v606 = vmul.f32 %v605, 1.442695
    %v607 = vpow.pop %v606
    %v608 = vadd.f32 %v607, 1.0
    %v609 = vrcp.pop %v608
    %v610 = vmul.f32 1.0, %v609
    %v611 = vtanh.pop %v604
    %v612 = vmul.f32 %v610, %v522
    %614 = vrot.lane.b32.xlu0 %v611, 64
    %v615 = vpop.permute.xlu0 %614
    %v617 = vmul.f32 %v610, %v615
    %619 = vrot.lane.b32.xlu0 %v617, 32
    %v620 = vpop.permute.xlu0 %619
    %v622 = vadd.f32 %v612, %v620
    %v623 = vtanh.pop %v622
    %625 = vrot.lane.b32.xlu0 %v623, 64
    %v626 = vpop.permute.xlu0 %625
    %v628 = vmul.f32 %v610, %v626
    %630 = vrot.lane.b32.xlu0 %v628, 32
    %v631 = vpop.permute.xlu0 %630
    %v632 = vsel %vm230, %v631, 0
    %634 = vmatprep.subr.mxu0 0.0
    %635 = vmatpush1.msra.mxu0 %v226
    %636 = vmatprep.subr.mxu0 0.0
    %637 = vmatpush1.msra.mxu0 %v227
    %638 = vmatprep.subr.mxu0 0.0
    %639 = vmatpush1.msra.mxu0 %v228
    %640 = vmatprep.subr.mxu0 0.0
    %641 = vmatpush1.msra.mxu0 %v229
    %642 = vmatprep.subr.mxu0 0.0
    %643 = vmatpush1.msra.mxu0 0.0
    %644 = vmatprep.subr.mxu0 0.0
    %645 = vmatpush1.msra.mxu0 0.0
    %646 = vmatprep.subr.mxu0 0.0
    %647 = vmatpush1.msra.mxu0 0.0
    %648 = vmatprep.subr.mxu0 0.0
    %649 = vmatpush1.msra.mxu0 0.0
    %650 = vmatprep.subr.mxu0 0.0
    %651 = vmatpush1.msra.mxu0 0.0
    %652 = vmatprep.subr.mxu0 0.0
    %653 = vmatpush1.msra.mxu0 0.0
    %654 = vmatprep.subr.mxu0 0.0
    %655 = vmatpush1.msra.mxu0 0.0
    %656 = vmatprep.subr.mxu0 0.0
    %657 = vmatpush1.msra.mxu0 0.0
    %658 = vmatprep.subr.mxu0 0.0
    %659 = vmatpush1.msra.mxu0 0.0
    %660 = vmatprep.subr.mxu0 0.0
    %661 = vmatpush1.msra.mxu0 0.0
    %662 = vmatprep.subr.mxu0 0.0
    %663 = vmatpush1.msra.mxu0 0.0
    %664 = vmatprep.subr.mxu0 0.0
    %665 = vmatpush1.msra.mxu0 0.0
    %666 = vmatprep.subr.mxu0 0.0
    %667 = vmatpush1.msra.mxu0 0.0
    %668 = vmatprep.subr.mxu0 0.0
    %669 = vmatpush1.msra.mxu0 0.0
    %670 = vmatprep.subr.mxu0 0.0
    %671 = vmatpush1.msra.mxu0 0.0
    %672 = vmatprep.subr.mxu0 0.0
    %673 = vmatpush1.msra.mxu0 0.0
    %674 = vmatprep.subr.mxu0 0.0
    %675 = vmatpush1.msra.mxu0 0.0
    %676 = vmatprep.subr.mxu0 0.0
    %677 = vmatpush1.msra.mxu0 0.0
    %678 = vmatprep.subr.mxu0 0.0
    %679 = vmatpush1.msra.mxu0 0.0
    %680 = vmatprep.subr.mxu0 0.0
    %681 = vmatpush1.msra.mxu0 0.0
    %682 = vmatprep.subr.mxu0 0.0
    %683 = vmatpush1.msra.mxu0 0.0
    %684 = vmatprep.subr.mxu0 0.0
    %685 = vmatpush1.msra.mxu0 0.0
    %686 = vmatprep.subr.mxu0 0.0
    %687 = vmatpush1.msra.mxu0 0.0
    %688 = vmatprep.subr.mxu0 0.0
    %689 = vmatpush1.msra.mxu0 0.0
    %690 = vmatprep.subr.mxu0 0.0
    %691 = vmatpush1.msra.mxu0 0.0
    %692 = vmatprep.subr.mxu0 0.0
    %693 = vmatpush1.msra.mxu0 0.0
    %694 = vmatprep.subr.mxu0 0.0
    %695 = vmatpush1.msra.mxu0 0.0
    %696 = vmatprep.subr.mxu0 0.0
    %697 = vmatpush1.msra.mxu0 0.0
    %698 = vmatprep.mubr.f32.mxu0 0.0
    %699 = vmatmul.mubr.f32.gmra.mrb[0].mxu0 %v632
    %v700 = vpop.f32.mrb[0].mxu0
    %v701 = vadd.f32 0.0, %v700
    %v702 = vpop.f32.mrb[0].mxu0
    %703 = vdwg.mxu0
    %v704 = vadd.f32 %v208, %v701
    %v705 = vxor.u32 %v704, 2147483648
    %v706 = vmul.f32 %v705, 1.442695
    %v707 = vpow.pop %v706
    %v708 = vadd.f32 %v707, 1.0
    %v709 = vrcp.pop %v708
    %v710 = vmul.f32 1.0, %v709
    %v711 = vtanh.pop %v704
    %v712 = vmul.f32 %v710, %v622
    %714 = vrot.lane.b32.xlu0 %v711, 64
    %v715 = vpop.permute.xlu0 %714
    %v717 = vmul.f32 %v710, %v715
    %719 = vrot.lane.b32.xlu0 %v717, 32
    %v720 = vpop.permute.xlu0 %719
    %v722 = vadd.f32 %v712, %v720
    %v723 = vtanh.pop %v722
    %725 = vrot.lane.b32.xlu0 %v723, 64
    %v726 = vpop.permute.xlu0 %725
    %v728 = vmul.f32 %v710, %v726
    %730 = vrot.lane.b32.xlu0 %v728, 32
    %v731 = vpop.permute.xlu0 %730
    %v732 = vsel %vm230, %v731, 0
    %734 = vmatprep.subr.mxu0 0.0
    %735 = vmatpush1.msra.mxu0 %v226
    %736 = vmatprep.subr.mxu0 0.0
    %737 = vmatpush1.msra.mxu0 %v227
    %738 = vmatprep.subr.mxu0 0.0
    %739 = vmatpush1.msra.mxu0 %v228
    %740 = vmatprep.subr.mxu0 0.0
    %741 = vmatpush1.msra.mxu0 %v229
    %742 = vmatprep.subr.mxu0 0.0
    %743 = vmatpush1.msra.mxu0 0.0
    %744 = vmatprep.subr.mxu0 0.0
    %745 = vmatpush1.msra.mxu0 0.0
    %746 = vmatprep.subr.mxu0 0.0
    %747 = vmatpush1.msra.mxu0 0.0
    %748 = vmatprep.subr.mxu0 0.0
    %749 = vmatpush1.msra.mxu0 0.0
    %750 = vmatprep.subr.mxu0 0.0
    %751 = vmatpush1.msra.mxu0 0.0
    %752 = vmatprep.subr.mxu0 0.0
    %753 = vmatpush1.msra.mxu0 0.0
    %754 = vmatprep.subr.mxu0 0.0
    %755 = vmatpush1.msra.mxu0 0.0
    %756 = vmatprep.subr.mxu0 0.0
    %757 = vmatpush1.msra.mxu0 0.0
    %758 = vmatprep.subr.mxu0 0.0
    %759 = vmatpush1.msra.mxu0 0.0
    %760 = vmatprep.subr.mxu0 0.0
    %761 = vmatpush1.msra.mxu0 0.0
    %762 = vmatprep.subr.mxu0 0.0
    %763 = vmatpush1.msra.mxu0 0.0
    %764 = vmatprep.subr.mxu0 0.0
    %765 = vmatpush1.msra.mxu0 0.0
    %766 = vmatprep.subr.mxu0 0.0
    %767 = vmatpush1.msra.mxu0 0.0
    %768 = vmatprep.subr.mxu0 0.0
    %769 = vmatpush1.msra.mxu0 0.0
    %770 = vmatprep.subr.mxu0 0.0
    %771 = vmatpush1.msra.mxu0 0.0
    %772 = vmatprep.subr.mxu0 0.0
    %773 = vmatpush1.msra.mxu0 0.0
    %774 = vmatprep.subr.mxu0 0.0
    %775 = vmatpush1.msra.mxu0 0.0
    %776 = vmatprep.subr.mxu0 0.0
    %777 = vmatpush1.msra.mxu0 0.0
    %778 = vmatprep.subr.mxu0 0.0
    %779 = vmatpush1.msra.mxu0 0.0
    %780 = vmatprep.subr.mxu0 0.0
    %781 = vmatpush1.msra.mxu0 0.0
    %782 = vmatprep.subr.mxu0 0.0
    %783 = vmatpush1.msra.mxu0 0.0
    %784 = vmatprep.subr.mxu0 0.0
    %785 = vmatpush1.msra.mxu0 0.0
    %786 = vmatprep.subr.mxu0 0.0
    %787 = vmatpush1.msra.mxu0 0.0
    %788 = vmatprep.subr.mxu0 0.0
    %789 = vmatpush1.msra.mxu0 0.0
    %790 = vmatprep.subr.mxu0 0.0
    %791 = vmatpush1.msra.mxu0 0.0
    %792 = vmatprep.subr.mxu0 0.0
    %793 = vmatpush1.msra.mxu0 0.0
    %794 = vmatprep.subr.mxu0 0.0
    %795 = vmatpush1.msra.mxu0 0.0
    %796 = vmatprep.subr.mxu0 0.0
    %797 = vmatpush1.msra.mxu0 0.0
    %798 = vmatprep.mubr.f32.mxu0 0.0
    %799 = vmatmul.mubr.f32.gmra.mrb[0].mxu0 %v732
    %v800 = vpop.f32.mrb[0].mxu0
    %v801 = vadd.f32 0.0, %v800
    %v802 = vpop.f32.mrb[0].mxu0
    %803 = vdwg.mxu0
    %v804 = vadd.f32 %v213, %v801
    %v805 = vxor.u32 %v804, 2147483648
    %v806 = vmul.f32 %v805, 1.442695
    %v807 = vpow.pop %v806
    %v808 = vadd.f32 %v807, 1.0
    %v809 = vrcp.pop %v808
    %v810 = vmul.f32 1.0, %v809
    %v811 = vtanh.pop %v804
    %v812 = vmul.f32 %v810, %v722
    %814 = vrot.lane.b32.xlu0 %v811, 64
    %v815 = vpop.permute.xlu0 %814
    %v817 = vmul.f32 %v810, %v815
    %819 = vrot.lane.b32.xlu0 %v817, 32
    %v820 = vpop.permute.xlu0 %819
    %v822 = vadd.f32 %v812, %v820
    %v823 = vtanh.pop %v822
    %825 = vrot.lane.b32.xlu0 %v823, 64
    %v826 = vpop.permute.xlu0 %825
    %v828 = vmul.f32 %v810, %v826
    %830 = vrot.lane.b32.xlu0 %v828, 32
    %v831 = vpop.permute.xlu0 %830
    %v832 = vsel %vm230, %v831, 0
    %834 = vmatprep.subr.mxu0 0.0
    %835 = vmatpush1.msra.mxu0 %v226
    %836 = vmatprep.subr.mxu0 0.0
    %837 = vmatpush1.msra.mxu0 %v227
    %838 = vmatprep.subr.mxu0 0.0
    %839 = vmatpush1.msra.mxu0 %v228
    %840 = vmatprep.subr.mxu0 0.0
    %841 = vmatpush1.msra.mxu0 %v229
    %842 = vmatprep.subr.mxu0 0.0
    %843 = vmatpush1.msra.mxu0 0.0
    %844 = vmatprep.subr.mxu0 0.0
    %845 = vmatpush1.msra.mxu0 0.0
    %846 = vmatprep.subr.mxu0 0.0
    %847 = vmatpush1.msra.mxu0 0.0
    %848 = vmatprep.subr.mxu0 0.0
    %849 = vmatpush1.msra.mxu0 0.0
    %850 = vmatprep.subr.mxu0 0.0
    %851 = vmatpush1.msra.mxu0 0.0
    %852 = vmatprep.subr.mxu0 0.0
    %853 = vmatpush1.msra.mxu0 0.0
    %854 = vmatprep.subr.mxu0 0.0
    %855 = vmatpush1.msra.mxu0 0.0
    %856 = vmatprep.subr.mxu0 0.0
    %857 = vmatpush1.msra.mxu0 0.0
    %858 = vmatprep.subr.mxu0 0.0
    %859 = vmatpush1.msra.mxu0 0.0
    %860 = vmatprep.subr.mxu0 0.0
    %861 = vmatpush1.msra.mxu0 0.0
    %862 = vmatprep.subr.mxu0 0.0
    %863 = vmatpush1.msra.mxu0 0.0
    %864 = vmatprep.subr.mxu0 0.0
    %865 = vmatpush1.msra.mxu0 0.0
    %866 = vmatprep.subr.mxu0 0.0
    %867 = vmatpush1.msra.mxu0 0.0
    %868 = vmatprep.subr.mxu0 0.0
    %869 = vmatpush1.msra.mxu0 0.0
    %870 = vmatprep.subr.mxu0 0.0
    %871 = vmatpush1.msra.mxu0 0.0
    %872 = vmatprep.subr.mxu0 0.0
    %873 = vmatpush1.msra.mxu0 0.0
    %874 = vmatprep.subr.mxu0 0.0
    %875 = vmatpush1.msra.mxu0 0.0
    %876 = vmatprep.subr.mxu0 0.0
    %877 = vmatpush1.msra.mxu0 0.0
    %878 = vmatprep.subr.mxu0 0.0
    %879 = vmatpush1.msra.mxu0 0.0
    %880 = vmatprep.subr.mxu0 0.0
    %881 = vmatpush1.msra.mxu0 0.0
    %882 = vmatprep.subr.mxu0 0.0
    %883 = vmatpush1.msra.mxu0 0.0
    %884 = vmatprep.subr.mxu0 0.0
    %885 = vmatpush1.msra.mxu0 0.0
    %886 = vmatprep.subr.mxu0 0.0
    %887 = vmatpush1.msra.mxu0 0.0
    %888 = vmatprep.subr.mxu0 0.0
    %889 = vmatpush1.msra.mxu0 0.0
    %890 = vmatprep.subr.mxu0 0.0
    %891 = vmatpush1.msra.mxu0 0.0
    %892 = vmatprep.subr.mxu0 0.0
    %893 = vmatpush1.msra.mxu0 0.0
    %894 = vmatprep.subr.mxu0 0.0
    %895 = vmatpush1.msra.mxu0 0.0
    %896 = vmatprep.subr.mxu0 0.0
    %897 = vmatpush1.msra.mxu0 0.0
    %898 = vmatprep.mubr.f32.mxu0 0.0
    %899 = vmatmul.mubr.f32.gmra.mrb[0].mxu0 %v832
    %v900 = vpop.f32.mrb[0].mxu0
    %v901 = vadd.f32 0.0, %v900
    %v902 = vpop.f32.mrb[0].mxu0
    %903 = vdwg.mxu0
    %v904 = vadd.f32 %v218, %v901
    %v905 = vxor.u32 %v904, 2147483648
    %v906 = vmul.f32 %v905, 1.442695
    %v907 = vpow.pop %v906
    %v908 = vadd.f32 %v907, 1.0
    %v909 = vrcp.pop %v908
    %v910 = vmul.f32 1.0, %v909
    %v911 = vtanh.pop %v904
    %v912 = vmul.f32 %v910, %v822
    %914 = vrot.lane.b32.xlu0 %v911, 64
    %v915 = vpop.permute.xlu0 %914
    %v917 = vmul.f32 %v910, %v915
    %919 = vrot.lane.b32.xlu0 %v917, 32
    %v920 = vpop.permute.xlu0 %919
    %v922 = vadd.f32 %v912, %v920
    %v923 = vtanh.pop %v922
    %925 = vrot.lane.b32.xlu0 %v923, 64
    %v926 = vpop.permute.xlu0 %925
    %v928 = vmul.f32 %v910, %v926
    %930 = vrot.lane.b32.xlu0 %v928, 32
    %v931 = vpop.permute.xlu0 %930
    %v932 = vsel %vm230, %v931, 0
    %934 = vmatprep.subr.mxu0 0.0
    %935 = vmatpush1.msra.mxu0 %v226
    %936 = vmatprep.subr.mxu0 0.0
    %937 = vmatpush1.msra.mxu0 %v227
    %938 = vmatprep.subr.mxu0 0.0
    %939 = vmatpush1.msra.mxu0 %v228
    %940 = vmatprep.subr.mxu0 0.0
    %941 = vmatpush1.msra.mxu0 %v229
    %942 = vmatprep.subr.mxu0 0.0
    %943 = vmatpush1.msra.mxu0 0.0
    %944 = vmatprep.subr.mxu0 0.0
    %945 = vmatpush1.msra.mxu0 0.0
    %946 = vmatprep.subr.mxu0 0.0
    %947 = vmatpush1.msra.mxu0 0.0
    %948 = vmatprep.subr.mxu0 0.0
    %949 = vmatpush1.msra.mxu0 0.0
    %950 = vmatprep.subr.mxu0 0.0
    %951 = vmatpush1.msra.mxu0 0.0
    %952 = vmatprep.subr.mxu0 0.0
    %953 = vmatpush1.msra.mxu0 0.0
    %954 = vmatprep.subr.mxu0 0.0
    %955 = vmatpush1.msra.mxu0 0.0
    %956 = vmatprep.subr.mxu0 0.0
    %957 = vmatpush1.msra.mxu0 0.0
    %958 = vmatprep.subr.mxu0 0.0
    %959 = vmatpush1.msra.mxu0 0.0
    %960 = vmatprep.subr.mxu0 0.0
    %961 = vmatpush1.msra.mxu0 0.0
    %962 = vmatprep.subr.mxu0 0.0
    %963 = vmatpush1.msra.mxu0 0.0
    %964 = vmatprep.subr.mxu0 0.0
    %965 = vmatpush1.msra.mxu0 0.0
    %966 = vmatprep.subr.mxu0 0.0
    %967 = vmatpush1.msra.mxu0 0.0
    %968 = vmatprep.subr.mxu0 0.0
    %969 = vmatpush1.msra.mxu0 0.0
    %970 = vmatprep.subr.mxu0 0.0
    %971 = vmatpush1.msra.mxu0 0.0
    %972 = vmatprep.subr.mxu0 0.0
    %973 = vmatpush1.msra.mxu0 0.0
    %974 = vmatprep.subr.mxu0 0.0
    %975 = vmatpush1.msra.mxu0 0.0
    %976 = vmatprep.subr.mxu0 0.0
    %977 = vmatpush1.msra.mxu0 0.0
    %978 = vmatprep.subr.mxu0 0.0
    %979 = vmatpush1.msra.mxu0 0.0
    %980 = vmatprep.subr.mxu0 0.0
    %981 = vmatpush1.msra.mxu0 0.0
    %982 = vmatprep.subr.mxu0 0.0
    %983 = vmatpush1.msra.mxu0 0.0
    %984 = vmatprep.subr.mxu0 0.0
    %985 = vmatpush1.msra.mxu0 0.0
    %986 = vmatprep.subr.mxu0 0.0
    %987 = vmatpush1.msra.mxu0 0.0
    %988 = vmatprep.subr.mxu0 0.0
    %989 = vmatpush1.msra.mxu0 0.0
    %990 = vmatprep.subr.mxu0 0.0
    %991 = vmatpush1.msra.mxu0 0.0
    %992 = vmatprep.subr.mxu0 0.0
    %993 = vmatpush1.msra.mxu0 0.0
    %994 = vmatprep.subr.mxu0 0.0
    %995 = vmatpush1.msra.mxu0 0.0
    %996 = vmatprep.subr.mxu0 0.0
    %997 = vmatpush1.msra.mxu0 0.0
    %998 = vmatprep.mubr.f32.mxu0 0.0
    %999 = vmatmul.mubr.f32.gmra.mrb[0].mxu0 %v932
    %v1000 = vpop.f32.mrb[0].mxu0
    %v1001 = vadd.f32 0.0, %v1000
    %v1002 = vpop.f32.mrb[0].mxu0
    %1003 = vdwg.mxu0
    %v1004 = vadd.f32 %v223, %v1001
    %v1005 = vxor.u32 %v1004, 2147483648
    %v1006 = vmul.f32 %v1005, 1.442695
    %v1007 = vpow.pop %v1006
    %v1008 = vadd.f32 %v1007, 1.0
    %v1009 = vrcp.pop %v1008
    %v1010 = vmul.f32 1.0, %v1009
    %v1011 = vtanh.pop %v1004
    %v1012 = vmul.f32 %v1010, %v922
    %1014 = vrot.lane.b32.xlu0 %v1011, 64
    %v1015 = vpop.permute.xlu0 %1014
    %v1017 = vmul.f32 %v1010, %v1015
    %1019 = vrot.lane.b32.xlu0 %v1017, 32
    %v1020 = vpop.permute.xlu0 %1019
    %v1022 = vadd.f32 %v1012, %v1020
    %v1023 = vtanh.pop %v1022
    %1025 = vrot.lane.b32.xlu0 %v1023, 64
    %v1026 = vpop.permute.xlu0 %1025
    %v1028 = vmul.f32 %v1010, %v1026
    %1030 = vrot.lane.b32.xlu0 %v1028, 32
    %v1031 = vpop.permute.xlu0 %1030
    %1033 = vst.msk [vmem:[#allocation5] sm:$0xff] %vm230, %v1031
    %1035 = vrot.lane.b32.xlu0 %v1022, 96
    %v1036 = vpop.permute.xlu0 %1035
    %1038 = vst.msk [vmem:[#allocation6] sm:$0xff] %vm230, %v1036
    // Predicated region
    $region18: #{tpu_custom_call.1} parent=1 // pred_check
      _
    $region19: #{tpu_custom_call.1} parent=1 // pred_check_branch
      %1040 = sbr.rel (0) target = $region21
    $region20: #{tpu_custom_call.1} parent=1 // pred_region
      %s1042 = ssub.s32 128, 128
      %1043 = vsyncadd [#allocation4], %s1042
      %s1045 = sshll.u32 [#allocation5], 4
      %s1046 = int_to_ptr.vmem [resolvable:$true] %s1045
      %1048 = dma.vmem_to_hbm [thread:$0]  %s1046, 128, %s3, [#allocation4]
    $region21: #{tpu_custom_call.1} parent=1 // pred_fallthru
      _
    // Predicated region
    $region22: #{tpu_custom_call.1} parent=1 // pred_check
      _
    $region23: #{tpu_custom_call.1} parent=1 // pred_check_branch
      %1050 = sbr.rel (0) target = $region25
    $region24: #{tpu_custom_call.1} parent=1 // pred_region
      %s1052 = ssub.s32 128, 128
      %1053 = vsyncadd [#allocation7], %s1052
      %s1055 = sshll.u32 [#allocation6], 4
      %s1056 = int_to_ptr.vmem [resolvable:$true] %s1055
      %1058 = dma.vmem_to_hbm [thread:$0]  %s1056, 128, %s4, [#allocation7]
    $region25: #{tpu_custom_call.1} parent=1 // pred_fallthru
      _
    // Predicated region
    $region26: #{tpu_custom_call.1} parent=1 // pred_check
      _
    $region27: #{tpu_custom_call.1} parent=1 // pred_check_branch
      %1060 = sbr.rel (0) target = $region29
    $region28: #{tpu_custom_call.1} parent=1 // pred_region
      %1061 = dma.done [#allocation4], 128
    $region29: #{tpu_custom_call.1} parent=1 // pred_fallthru
      _
    // Predicated region
    $region30: #{tpu_custom_call.1} parent=1 // pred_check
      _
    $region31: #{tpu_custom_call.1} parent=1 // pred_check_branch
      %1063 = sbr.rel (0) target = $region33
    $region32: #{tpu_custom_call.1} parent=1 // pred_region
      %1064 = dma.done [#allocation7], 128
    $region33: #{tpu_custom_call.1} parent=1 // pred_fallthru
      _
    %1065 = vsyncpa [#allocation3], 1
    %1066 = vsyncpa [#allocation4], 1
    %1067 = vsyncpa [#allocation7], 1

</llo_original>
